<compile_context>
chip_gen: v6e
topology: v6e:2x2x1
jax: 0.10.0
libtpu: 0.0.40
codegen_flags: <defaults>
</compile_context>

<pallas_src>
import math

import jax
import jax.numpy as jnp
from jax.experimental import pallas as pl
from jax.experimental.pallas import tpu as pltpu


def _stochastic_depth_kernel(x_ref, scale_ref, o_ref):
    """Streaming multiply: (B_tile, L_tile) slab * per-row (B_tile, 1) scale."""
    o_ref[...] = x_ref[...] * scale_ref[...]


def _choose_block(n, l, itemsize):
    """Pick (b_tile, l_tile) so one block stays <= ~4 MiB.

    With input + output double-buffered that keeps pipeline VMEM around 16 MiB
    while still giving large, lane-dense blocks that amortize the ~0.35 us
    per-grid-step overhead.  Block-shape rules honored: last dim is a multiple
    of 128 or the full axis; second-to-last is a multiple of 8 or the full axis.
    """
    max_block_bytes = 4 * 1024 * 1024
    row_bytes = l * itemsize

    if n * row_bytes <= max_block_bytes:
        return n, l  # whole tensor in a single block

    rows_fit = max_block_bytes // max(row_bytes, 1)
    if rows_fit >= 8:
        b_tile = max(8, (min(rows_fit, n) // 8) * 8)
        return b_tile, l

    # Rows themselves are huge: also tile the flattened feature axis.
    b_tile = n if n < 8 else 8
    l_tile = (max_block_bytes // (b_tile * itemsize)) // 128 * 128
    l_tile = max(128, min(l_tile, l))
    return b_tile, l_tile


def stochastic_depth(x, *, prob, key, mode="row", training=True):
    """Pallas implementation of StochasticDepth.forward.

    x: (N, ...) array.  Returns an array of the same shape/dtype.
    """
    if prob == 0.0 or not training:
        return x

    survival = 1.0 - prob
    N = x.shape[0]
    L = math.prod(x.shape[1:])

    # Keep decisions drawn once in the wrapper (no in-kernel PRNG).
    if mode == "row":
        keep = jax.random.bernoulli(key, p=survival, shape=(N,))
    else:  # 'batch': one decision shared by every sample
        keep = jnp.broadcast_to(jax.random.bernoulli(key, p=survival, shape=()), (N,))
    scale = (keep.astype(jnp.float32) / jnp.float32(survival)).astype(x.dtype)
    scale2 = scale.reshape(N, 1)

    # Lane-dense flattened layout: last axis = C*H*W.
    x2 = x.reshape(N, L)
    itemsize = jnp.dtype(x.dtype).itemsize
    b_tile, l_tile = _choose_block(N, L, itemsize)
    grid = (pl.cdiv(N, b_tile), pl.cdiv(L, l_tile))

    out = pl.pallas_call(
        _stochastic_depth_kernel,
        out_shape=jax.ShapeDtypeStruct((N, L), x.dtype),
        grid=grid,
        in_specs=[
            pl.BlockSpec((b_tile, l_tile), lambda bi, li: (bi, li)),
            pl.BlockSpec((b_tile, 1), lambda bi, li: (bi, 0)),
        ],
        out_specs=pl.BlockSpec((b_tile, l_tile), lambda bi, li: (bi, li)),
        compiler_params=pltpu.CompilerParams(
            dimension_semantics=("parallel", "parallel"),
            vmem_limit_bytes=32 * 1024 * 1024,
        ),
    )(x2, scale2)

    return out.reshape(x.shape)


if __name__ == "__main__":
    key = jax.random.PRNGKey(0)
    kx, krow, kbatch = jax.random.split(key, 3)

    N, C, H, W = 2, 4, 16, 16
    x = jax.random.normal(kx, (N, C, H, W), dtype=jnp.float32)

    prob = 0.5
    survival = 1.0 - prob
    ok = True

    # Training path (row mode): each sample is either zeroed or scaled by 1/survival.
    y = stochastic_depth(x, prob=prob, key=krow, mode="row", training=True)
    y = jax.block_until_ready(y)
    for n in range(N):
        row = y[n]
        is_zero = bool(jnp.allclose(row, 0.0))
        is_scaled = bool(jnp.allclose(row, x[n] / survival, atol=1e-6))
        if not (is_zero or is_scaled):
            ok = False

    # Batch mode: all samples must share the same keep decision.
    yb = stochastic_depth(x, prob=prob, key=kbatch, mode="batch", training=True)
    yb = jax.block_until_ready(yb)
    all_zero = bool(jnp.allclose(yb, 0.0))
    all_scaled = bool(jnp.allclose(yb, x / survival, atol=1e-6))
    if not (all_zero or all_scaled):
        ok = False

    # Eval / prob==0 path: identity (no kernel launch, matches PyTorch).
    y_eval = stochastic_depth(x, prob=prob, key=krow, mode="row", training=False)
    if not bool(jnp.allclose(y_eval, x)):
        ok = False
    y_p0 = stochastic_depth(x, prob=0.0, key=krow, mode="row", training=True)
    if not bool(jnp.allclose(y_p0, x)):
        ok = False

    if ok:
        print("KERNEL_OK")
    else:
        raise SystemExit("stochastic depth output did not match expected semantics")
</pallas_src>

<mosaic_0001>
module attributes {stable_mosaic.version = 11 : i64} {
  func.func @_stochastic_depth_kernel(%arg0: i32, %arg1: i32, %arg2: memref<2x1024xf32, #tpu.memory_space<vmem>>, %arg3: memref<2x1xf32, #tpu.memory_space<vmem>>, %arg4: memref<2x1024xf32, #tpu.memory_space<vmem>>) attributes {dimension_semantics = [#tpu.dimension_semantics<parallel>, #tpu.dimension_semantics<parallel>], iteration_bounds = array<i64: 1, 1>, scalar_prefetch = 0 : i64, scratch_operands = 0 : i64, tpu.core_type = #tpu.core_type<tc>, window_params = [{transform_indices = @transform_0, window_bounds = array<i64: 2, 1024>}, {transform_indices = @transform_1, window_bounds = array<i64: 2, 1>}, {transform_indices = @transform_2, window_bounds = array<i64: 2, 1024>}]} {
    %c0 = arith.constant 0 : index
    %c0_0 = arith.constant 0 : index
    %0 = vector.load %arg2[%c0, %c0_0] : memref<2x1024xf32, #tpu.memory_space<vmem>>, vector<2x1024xf32>
    %c0_1 = arith.constant 0 : index
    %c0_2 = arith.constant 0 : index
    %1 = vector.load %arg3[%c0_1, %c0_2] : memref<2x1xf32, #tpu.memory_space<vmem>>, vector<2x1xf32>
    %2 = vector.broadcast %1 : vector<2x1xf32> to vector<2x1024xf32>
    %3 = arith.mulf %0, %2 : vector<2x1024xf32>
    %c0_3 = arith.constant 0 : index
    %c0_4 = arith.constant 0 : index
    %4 = vector.load %arg4[%c0_3, %c0_4] : memref<2x1024xf32, #tpu.memory_space<vmem>>, vector<2x1024xf32>
    tpu.vector_store %arg4[%c0_3, %c0_4], %3 {strides = array<i32>} : memref<2x1024xf32, #tpu.memory_space<vmem>>, vector<2x1024xf32>,
    return
  }
  func.func @transform_0(%arg0: i32, %arg1: i32) -> (i32, i32) {
    %c0_i32 = arith.constant 0 : i32
    return %arg0, %arg1 : i32, i32
  }
  func.func @transform_1(%arg0: i32, %arg1: i32) -> (i32, i32) {
    %c0_i32 = arith.constant 0 : i32
    %c0_i32_0 = arith.constant 0 : i32
    return %arg0, %c0_i32 : i32, i32
  }
  func.func @transform_2(%arg0: i32, %arg1: i32) -> (i32, i32) {
    %c0_i32 = arith.constant 0 : i32
    return %arg0, %arg1 : i32, i32
  }
}

</mosaic_0001>

<llo_original>
// kernel: tpu_custom_call.1
$region0: #{tpu_custom_call.1}
  #allocation0 [shape = 'u32[]', space=smem, size = 0x4, offset = 0x4, fixed_abs, tag = 'smem constant byte address 0x4 - core index']
  #allocation1 [shape = 'u32[144,128]{1,0:T(1,128)}', space=vmem, size = 0x12000, scoped, tag = 'internal scratch']
  %s0 = inlined_call_operand.hbm [shape: f32[2,1024], index: 0, kind: input, shape index: {}]
  %s1 = inlined_call_operand.vmem [shape: f32[2,1], index: 1, kind: input, shape index: {}]
  %s2 = inlined_call_operand.hbm [shape: f32[2,1024], index: 2, kind: output, shape index: {}]
  %s3 = sld [smem:[#allocation0]]
  $region22: #{tpu_custom_call.1} parent=0
    _
  %s5 = ssub.s32 1, %s3
  %s6 = scalar_select 0, %s5, %s3
  $region1: #{tpu_custom_call.1} parent=0
    #allocation2 [shape = 'u8[8192]{0}', space=vmem, size = 0x2000, scoped, tag = 'input window, operand 0, single buffered']
    #allocation3 [shape = 's32[1]{0}', space=sflag, size = 0x4, scoped, tag = 'scoped memory for tpu_custom_call.1']
    #allocation4 [shape = 's32[1]{0}', space=sflag, size = 0x4, scoped, tag = 'scoped memory for tpu_custom_call.1']
    #allocation5 [shape = 'u8[8192]{0}', space=vmem, size = 0x2000, scoped, tag = 'output window, operand 0, single buffered']
    %7 = vsyncpa [#allocation3], 0
    %8 = vsyncpa [#allocation4], 0
    // Predicated region
    $region2: #{tpu_custom_call.1} parent=1 // pred_check
      _
    $region3: #{tpu_custom_call.1} parent=1 // pred_check_branch
      %10 = sbr.rel (0) target = $region5
    $region4: #{tpu_custom_call.1} parent=1 // pred_region
      %s12 = ssub.s32 256, 256
      %13 = vsyncadd [#allocation3], %s12
      %s15 = sshll.u32 [#allocation2], 4
      %s16 = int_to_ptr.vmem [resolvable:$true] %s15
      %18 = dma.hbm_to_vmem [thread:$0]  %s0, 256, %s16, [#allocation3]
    $region5: #{tpu_custom_call.1} parent=1 // pred_fallthru
      _
    // Predicated region
    $region6: #{tpu_custom_call.1} parent=1 // pred_check
      _
    $region7: #{tpu_custom_call.1} parent=1 // pred_check_branch
      %20 = sbr.rel (0) target = $region9
    $region8: #{tpu_custom_call.1} parent=1 // pred_region
      _
    $region9: #{tpu_custom_call.1} parent=1 // pred_fallthru
      _
    // Predicated region
    $region10: #{tpu_custom_call.1} parent=1 // pred_check
      _
    $region11: #{tpu_custom_call.1} parent=1 // pred_check_branch
      %22 = sbr.rel (0) target = $region13
    $region12: #{tpu_custom_call.1} parent=1 // pred_region
      %23 = dma.done [#allocation3], 256
    $region13: #{tpu_custom_call.1} parent=1 // pred_fallthru
      _
    %v24 = vld [vmem:[#allocation2] sm:$0xff]
    %v25 = vld [vmem:[#allocation2 + $0x8] sm:$0xff]
    %v26 = vld [vmem:[%s1] sm:$0x3]
    %28 = vset.pattern.permute.xlu0 0
    %29 = vperm.xlu0 %28, %v26
    %v30 = vpop.permute.xlu0 %29
    %v32 = vunpack.c.l.s4 269488144
    %v33 = vunpack.c.0.s8 %v32
    %v34 = vlaneseq
    %v35 = vshrl.u32 %v34, 7
    %v36 = vsub.s32 %v33, %v35
    %v37 = vrot.slane %v30, %v36
    %v39 = vmul.f32 %v24, %v37
    %v40 = vmul.f32 %v25, %v37
    %41 = vst [vmem:[#allocation5] sm:$0xff] %v39
    %42 = vst [vmem:[#allocation5 + $0x8] sm:$0xff] %v40
    // Predicated region
    $region14: #{tpu_custom_call.1} parent=1 // pred_check
      _
    $region15: #{tpu_custom_call.1} parent=1 // pred_check_branch
      %44 = sbr.rel (0) target = $region17
    $region16: #{tpu_custom_call.1} parent=1 // pred_region
      %s46 = ssub.s32 256, 256
      %47 = vsyncadd [#allocation4], %s46
      %s49 = sshll.u32 [#allocation5], 4
      %s50 = int_to_ptr.vmem [resolvable:$true] %s49
      %52 = dma.vmem_to_hbm [thread:$0]  %s50, 256, %s2, [#allocation4]
    $region17: #{tpu_custom_call.1} parent=1 // pred_fallthru
      _
    // Predicated region
    $region18: #{tpu_custom_call.1} parent=1 // pred_check
      _
    $region19: #{tpu_custom_call.1} parent=1 // pred_check_branch
      %54 = sbr.rel (0) target = $region21
    $region20: #{tpu_custom_call.1} parent=1 // pred_region
      %55 = dma.done [#allocation4], 256
    $region21: #{tpu_custom_call.1} parent=1 // pred_fallthru
      _
    %56 = vsyncpa [#allocation3], 1
    %57 = vsyncpa [#allocation4], 1

</llo_original>
